<compile_context>
chip_gen: v5e
topology: v5e:2x2
jax: 0.10.0
libtpu: 0.0.40
codegen_flags: <defaults>
</compile_context>

<pallas_src>
import functools
import random

import jax
import jax.numpy as jnp
import numpy as np
from jax.experimental import pallas as pl
from jax.experimental.pallas import tpu as pltpu


_GRAY_W = (0.2989, 0.587, 0.114)   # rgb_to_grayscale weights
_LANE = 128


# ---------------------------------------------------------------------------
# Pallas kernel: fused brightness/contrast/saturation + channel permutation.
# Grid = (cdiv(N, TB),); each step processes TB images laid out as dense
# (R, 128) per-channel slabs, entirely in VMEM.
# ---------------------------------------------------------------------------
def _color_jitter_kernel(fac_ref, x_ref, o_ref, *, ops, perm, n_valid):
    # fac_ref: SMEM (3,) f32  [brightness, contrast, saturation] factors
    # x_ref  : VMEM (TB, 3, R, 128)
    # o_ref  : VMEM (TB, 3, R, 128)
    img = x_ref[...].astype(jnp.float32)           # (TB, 3, R, 128)
    _, _, r, lane = img.shape

    def grayscale(im):                             # (TB, 1, R, 128)
        return (_GRAY_W[0] * im[:, 0:1]
                + _GRAY_W[1] * im[:, 1:2]
                + _GRAY_W[2] * im[:, 2:3])

    # `ops` is a static tuple of (name, factor_index) in the randomized order
    # drawn on the host — same control flow as the PyTorch forward() loop.
    for name, fidx in ops:
        f = fac_ref[fidx]                          # scalar from SMEM
        if name == "brightness":
            # blend(img, 0, f) = clamp(f*img, 0, 1)
            img = jnp.clip(f * img, 0.0, 1.0)
        elif name == "contrast":
            g = grayscale(img)
            # Mask pad pixels so the per-image grayscale mean is unbiased.
            row = jax.lax.broadcasted_iota(jnp.int32, (r, lane), 0)
            col = jax.lax.broadcasted_iota(jnp.int32, (r, lane), 1)
            valid = (row * lane + col) < n_valid
            s = jnp.sum(jnp.where(valid, g, 0.0), axis=(2, 3), keepdims=True)
            mean = s * (1.0 / float(n_valid))      # (TB, 1, 1, 1) per-image
            img = jnp.clip(f * img + (1.0 - f) * mean, 0.0, 1.0)
        elif name == "saturation":
            g = grayscale(img)
            img = jnp.clip(f * img + (1.0 - f) * g, 0.0, 1.0)

    # invert_channel: static host-side permutation fused into the stores
    # (per-channel stores, no concat temp / cross-sublane shuffle).
    for i, p in enumerate(perm):
        o_ref[:, i:i + 1, :, :] = img[:, p:p + 1, :, :].astype(o_ref.dtype)


def color_jitter_pallas(img, ops, factors, perm):
    """img: (N, 3, H, W) float array in [0, 1]."""
    N, C, H, W = img.shape
    assert C == 3, "ColorJitter expects RGB (C == 3) input"
    L = H * W
    L_pad = ((L + _LANE - 1) // _LANE) * _LANE
    R = L_pad // _LANE

    # Dense lane layout: each channel becomes a (R, 128) slab.
    x = img.reshape(N, C, L)
    if L_pad != L:
        x = jnp.pad(x, ((0, 0), (0, 0), (0, L_pad - L)))
    x = x.reshape(N, C, R, _LANE)

    # Batch images per grid step so a block is ~1 MiB (amortize per-step
    # overhead) but keep >= 2 grid steps when possible (feed both v7x TCs).
    itemsize = jnp.dtype(img.dtype).itemsize
    bytes_per_image = C * R * _LANE * itemsize
    target_block_bytes = 1 << 20
    TB = max(1, min(N, target_block_bytes // max(1, bytes_per_image)))
    if N >= 2:
        TB = min(TB, max(1, pl.cdiv(N, 2)))
    n_blocks = pl.cdiv(N, TB)
    N_pad = n_blocks * TB
    if N_pad != N:
        x = jnp.pad(x, ((0, N_pad - N), (0, 0), (0, 0), (0, 0)))

    fac = jnp.asarray(factors, dtype=jnp.float32)

    kernel = functools.partial(_color_jitter_kernel,
                               ops=tuple(ops), perm=tuple(perm), n_valid=L)

    n_ops = max(1, len(ops))
    cost = pl.CostEstimate(
        flops=int(5 * n_ops * N * C * L),
        transcendentals=0,
        bytes_accessed=int(2 * N * C * L * itemsize),
    )

    out = pl.pallas_call(
        kernel,
        out_shape=jax.ShapeDtypeStruct((N_pad, C, R, _LANE), img.dtype),
        grid_spec=pltpu.PrefetchScalarGridSpec(
            num_scalar_prefetch=0,
            grid=(n_blocks,),
            in_specs=[
                pl.BlockSpec(memory_space=pltpu.MemorySpace.SMEM),  # factors
                pl.BlockSpec((TB, C, R, _LANE), lambda b: (b, 0, 0, 0)),
            ],
            out_specs=pl.BlockSpec((TB, C, R, _LANE), lambda b: (b, 0, 0, 0)),
        ),
        compiler_params=pltpu.CompilerParams(
            dimension_semantics=("parallel",),
            vmem_limit_bytes=64 * 1024 * 1024,
        ),
        cost_estimate=cost,
    )(fac, x)

    out = out.reshape(N_pad, C, L_pad)[:N, :, :L]
    return out.reshape(N, C, H, W)


# ---------------------------------------------------------------------------
# Module wrapper reproducing ColorJitter semantics
# ---------------------------------------------------------------------------
class ColorJitterPallas:
    def __init__(self, brightness=0, contrast=0, saturation=0, hue=0,
                 invert_channel=True):
        self.brightness = self._check_input(brightness, "brightness")
        self.contrast = self._check_input(contrast, "contrast")
        self.saturation = self._check_input(saturation, "saturation")
        self.hue = self._check_input(hue, "hue", center=0, bound=(-0.5, 0.5),
                                     clip_first_on_zero=False)
        self.invert_channel = invert_channel

    @staticmethod
    def _check_input(value, name, center=1, bound=(0, float("inf")),
                     clip_first_on_zero=True):
        if isinstance(value, (int, float)):
            if value < 0:
                raise ValueError(f"If {name} is a single number, it must be non negative.")
            value = [center - float(value), center + float(value)]
            if clip_first_on_zero:
                value[0] = max(value[0], 0.0)
        elif isinstance(value, (tuple, list)) and len(value) == 2:
            if not bound[0] <= value[0] <= value[1] <= bound[1]:
                raise ValueError(f"{name} values should be between {bound}")
        else:
            raise TypeError(f"{name} should be a single number or a list/tuple with length 2.")
        if value[0] == value[1] == center:
            value = None
        return value

    def get_params(self, rng: random.Random):
        """Draw the randomized op order, factors and channel permutation."""
        fn_idx = [0, 1, 2]
        rng.shuffle(fn_idx)                       # torch.randperm(3)
        ops = []
        factors = [1.0, 1.0, 1.0]
        for fn_id in fn_idx:
            if fn_id == 0 and self.brightness is not None:
                factors[0] = rng.uniform(self.brightness[0], self.brightness[1])
                ops.append(("brightness", 0))
            elif fn_id == 1 and self.contrast is not None:
                factors[1] = rng.uniform(self.contrast[0], self.contrast[1])
                ops.append(("contrast", 1))
            elif fn_id == 2 and self.saturation is not None:
                factors[2] = rng.uniform(self.saturation[0], self.saturation[1])
                ops.append(("saturation", 2))
        if self.invert_channel:
            perm = tuple(rng.sample(range(3), 3))  # np.random.permutation(3)
        else:
            perm = (0, 1, 2)
        return tuple(ops), tuple(factors), perm

    def __call__(self, img: jnp.ndarray, rng: random.Random):
        ops, factors, perm = self.get_params(rng)
        squeezed = False
        if img.ndim == 3:
            img = img[None]
            squeezed = True
        if jnp.issubdtype(img.dtype, jnp.floating):
            out = color_jitter_pallas(img, ops, factors, perm)
        else:
            # Matches the spec's uint8 path (float()/255 ... *255, clamp,
            # .byte() which truncates).  TODO(synk): fuse into the kernel.
            x = img.astype(jnp.float32) / 255.0
            out = color_jitter_pallas(x, ops, factors, perm)
            out = jnp.clip(out * 255.0, 0.0, 255.0).astype(jnp.uint8)
        if squeezed:
            out = out[0]
        return out


# ---------------------------------------------------------------------------
# Reference (plain jnp) for validation
# ---------------------------------------------------------------------------
def _reference_jitter(img, ops, factors, perm):
    x = img.astype(jnp.float32)

    def gray(z):  # (N,1,H,W)
        return (_GRAY_W[0] * z[:, 0] + _GRAY_W[1] * z[:, 1]
                + _GRAY_W[2] * z[:, 2])[:, None]

    for name, fidx in ops:
        f = factors[fidx]
        if name == "brightness":
            x = jnp.clip(f * x, 0.0, 1.0)
        elif name == "contrast":
            mean = jnp.mean(gray(x), axis=(-3, -2, -1), keepdims=True)
            x = jnp.clip(f * x + (1.0 - f) * mean, 0.0, 1.0)
        elif name == "saturation":
            x = jnp.clip(f * x + (1.0 - f) * gray(x), 0.0, 1.0)
    x = x[:, list(perm)]
    return x.astype(img.dtype)


if __name__ == "__main__":
    key = jax.random.PRNGKey(0)
    x = jax.random.uniform(key, (2, 3, 16, 16), dtype=jnp.float32)  # NCHW, RGB

    module = ColorJitterPallas(brightness=0.4, contrast=0.4, saturation=0.4,
                               hue=0.2, invert_channel=True)

    out = module(x, random.Random(0))
    out = jax.block_until_ready(out)

    # Re-derive the identical random parameters and compare with plain JAX.
    ops, factors, perm = module.get_params(random.Random(0))
    ref = _reference_jitter(x, ops, factors, perm)
    np.testing.assert_allclose(np.asarray(out), np.asarray(ref),
                               rtol=1e-5, atol=1e-5)

    assert out.shape == x.shape and out.dtype == x.dtype
    print("KERNEL_OK")
</pallas_src>

<mosaic_0001>
module attributes {stable_mosaic.version = 11 : i64} {
  func.func @_color_jitter_kernel(%arg0: i32, %arg1: memref<3xf32, #tpu.memory_space<smem>>, %arg2: memref<1x3x2x128xf32, #tpu.memory_space<vmem>>, %arg3: memref<1x3x2x128xf32, #tpu.memory_space<vmem>>) attributes {dimension_semantics = [#tpu.dimension_semantics<parallel>], iteration_bounds = array<i64: 2>, scalar_prefetch = 0 : i64, scratch_operands = 0 : i64, tpu.core_type = #tpu.core_type<tc>, window_params = [{transform_indices = @transform_0, window_bounds = array<i64: 3>}, {transform_indices = @transform_1, window_bounds = array<i64: 1, 3, 2, 128>}, {transform_indices = @transform_2, window_bounds = array<i64: 1, 3, 2, 128>}]} {
    %c0 = arith.constant 0 : index
    %c0_0 = arith.constant 0 : index
    %c0_1 = arith.constant 0 : index
    %c0_2 = arith.constant 0 : index
    %0 = vector.load %arg2[%c0, %c0_0, %c0_1, %c0_2] : memref<1x3x2x128xf32, #tpu.memory_space<vmem>>, vector<1x3x2x128xf32>
    %c0_3 = arith.constant 0 : index
    %1 = memref.load %arg1[%c0_3] : memref<3xf32, #tpu.memory_space<smem>>
    %2 = vector.broadcast %1 : f32 to vector<1x3x2x128xf32>
    %3 = arith.mulf %2, %0 : vector<1x3x2x128xf32>
    %cst = arith.constant 0.000000e+00 : f32
    %cst_4 = arith.constant 1.000000e+00 : f32
    %4 = vector.broadcast %cst : f32 to vector<1x3x2x128xf32>
    %5 = arith.maximumf %4, %3 : vector<1x3x2x128xf32>
    %6 = vector.broadcast %cst_4 : f32 to vector<1x3x2x128xf32>
    %7 = arith.minimumf %6, %5 : vector<1x3x2x128xf32>
    %c2 = arith.constant 2 : index
    %8 = memref.load %arg1[%c2] : memref<3xf32, #tpu.memory_space<smem>>
    %9 = vector.extract_strided_slice %7 {offsets = [0, 0, 0, 0], sizes = [1, 1, 2, 128], strides = [1, 1, 1, 1]} : vector<1x3x2x128xf32> to vector<1x1x2x128xf32>
    %cst_5 = arith.constant 2.989000e-01 : f32
    %10 = vector.broadcast %cst_5 : f32 to vector<1x1x2x128xf32>
    %11 = arith.mulf %10, %9 : vector<1x1x2x128xf32>
    %12 = vector.extract_strided_slice %7 {offsets = [0, 1, 0, 0], sizes = [1, 1, 2, 128], strides = [1, 1, 1, 1]} : vector<1x3x2x128xf32> to vector<1x1x2x128xf32>
    %cst_6 = arith.constant 5.870000e-01 : f32
    %13 = vector.broadcast %cst_6 : f32 to vector<1x1x2x128xf32>
    %14 = arith.mulf %13, %12 : vector<1x1x2x128xf32>
    %15 = arith.addf %11, %14 : vector<1x1x2x128xf32>
    %16 = vector.extract_strided_slice %7 {offsets = [0, 2, 0, 0], sizes = [1, 1, 2, 128], strides = [1, 1, 1, 1]} : vector<1x3x2x128xf32> to vector<1x1x2x128xf32>
    %cst_7 = arith.constant 1.140000e-01 : f32
    %17 = vector.broadcast %cst_7 : f32 to vector<1x1x2x128xf32>
    %18 = arith.mulf %17, %16 : vector<1x1x2x128xf32>
    %19 = arith.addf %15, %18 : vector<1x1x2x128xf32>
    %20 = vector.broadcast %8 : f32 to vector<1x3x2x128xf32>
    %21 = arith.mulf %20, %7 : vector<1x3x2x128xf32>
    %cst_8 = arith.constant 1.000000e+00 : f32
    %22 = arith.subf %cst_8, %8 : f32
    %23 = vector.broadcast %22 : f32 to vector<1x1x2x128xf32>
    %24 = arith.mulf %23, %19 : vector<1x1x2x128xf32>
    %25 = vector.broadcast %24 : vector<1x1x2x128xf32> to vector<1x3x2x128xf32>
    %26 = arith.addf %21, %25 : vector<1x3x2x128xf32>
    %cst_9 = arith.constant 0.000000e+00 : f32
    %cst_10 = arith.constant 1.000000e+00 : f32
    %27 = vector.broadcast %cst_9 : f32 to vector<1x3x2x128xf32>
    %28 = arith.maximumf %27, %26 : vector<1x3x2x128xf32>
    %29 = vector.broadcast %cst_10 : f32 to vector<1x3x2x128xf32>
    %30 = arith.minimumf %29, %28 : vector<1x3x2x128xf32>
    %c1 = arith.constant 1 : index
    %31 = memref.load %arg1[%c1] : memref<3xf32, #tpu.memory_space<smem>>
    %32 = vector.extract_strided_slice %30 {offsets = [0, 0, 0, 0], sizes = [1, 1, 2, 128], strides = [1, 1, 1, 1]} : vector<1x3x2x128xf32> to vector<1x1x2x128xf32>
    %cst_11 = arith.constant 2.989000e-01 : f32
    %33 = vector.broadcast %cst_11 : f32 to vector<1x1x2x128xf32>
    %34 = arith.mulf %33, %32 : vector<1x1x2x128xf32>
    %35 = vector.extract_strided_slice %30 {offsets = [0, 1, 0, 0], sizes = [1, 1, 2, 128], strides = [1, 1, 1, 1]} : vector<1x3x2x128xf32> to vector<1x1x2x128xf32>
    %cst_12 = arith.constant 5.870000e-01 : f32
    %36 = vector.broadcast %cst_12 : f32 to vector<1x1x2x128xf32>
    %37 = arith.mulf %36, %35 : vector<1x1x2x128xf32>
    %38 = arith.addf %34, %37 : vector<1x1x2x128xf32>
    %39 = vector.extract_strided_slice %30 {offsets = [0, 2, 0, 0], sizes = [1, 1, 2, 128], strides = [1, 1, 1, 1]} : vector<1x3x2x128xf32> to vector<1x1x2x128xf32>
    %cst_13 = arith.constant 1.140000e-01 : f32
    %40 = vector.broadcast %cst_13 : f32 to vector<1x1x2x128xf32>
    %41 = arith.mulf %40, %39 : vector<1x1x2x128xf32>
    %42 = arith.addf %38, %41 : vector<1x1x2x128xf32>
    %43 = tpu.iota {dimensions = array<i32: 0>} : vector<2x128xi32>
    %44 = tpu.iota {dimensions = array<i32: 1>} : vector<2x128xi32>
    %c128_i32 = arith.constant 128 : i32
    %45 = vector.broadcast %c128_i32 : i32 to vector<2x128xi32>
    %46 = arith.muli %43, %45 : vector<2x128xi32>
    %47 = arith.addi %46, %44 : vector<2x128xi32>
    %c256_i32 = arith.constant 256 : i32
    %48 = vector.broadcast %c256_i32 : i32 to vector<2x128xi32>
    %49 = arith.cmpi slt, %47, %48 : vector<2x128xi32>
    %cst_14 = arith.constant 0.000000e+00 : f32
    %50 = vector.shape_cast %49 : vector<2x128xi1> to vector<1x1x2x128xi1>
    %51 = vector.broadcast %cst_14 : f32 to vector<1x1x2x128xf32>
    %52 = arith.select %50, %42, %51 : vector<1x1x2x128xi1>, vector<1x1x2x128xf32>
    %cst_15 = arith.constant dense<0.000000e+00> : vector<1x1xf32>
    %53 = vector.multi_reduction <add>, %52, %cst_15 [2, 3] : vector<1x1x2x128xf32> to vector<1x1xf32>
    %54 = vector.shape_cast %53 : vector<1x1xf32> to vector<1x1x1x1xf32>
    %cst_16 = arith.constant 3.906250e-03 : f32
    %55 = vector.broadcast %cst_16 : f32 to vector<1x1x1x1xf32>
    %56 = arith.mulf %54, %55 : vector<1x1x1x1xf32>
    %57 = vector.broadcast %31 : f32 to vector<1x3x2x128xf32>
    %58 = arith.mulf %57, %30 : vector<1x3x2x128xf32>
    %cst_17 = arith.constant 1.000000e+00 : f32
    %59 = arith.subf %cst_17, %31 : f32
    %60 = vector.broadcast %59 : f32 to vector<1x1x1x1xf32>
    %61 = arith.mulf %60, %56 : vector<1x1x1x1xf32>
    %62 = vector.broadcast %61 : vector<1x1x1x1xf32> to vector<1x3x2x128xf32>
    %63 = arith.addf %58, %62 : vector<1x3x2x128xf32>
    %cst_18 = arith.constant 0.000000e+00 : f32
    %cst_19 = arith.constant 1.000000e+00 : f32
    %64 = vector.broadcast %cst_18 : f32 to vector<1x3x2x128xf32>
    %65 = arith.maximumf %64, %63 : vector<1x3x2x128xf32>
    %66 = vector.broadcast %cst_19 : f32 to vector<1x3x2x128xf32>
    %67 = arith.minimumf %66, %65 : vector<1x3x2x128xf32>
    %68 = vector.extract_strided_slice %67 {offsets = [0, 1, 0, 0], sizes = [1, 1, 2, 128], strides = [1, 1, 1, 1]} : vector<1x3x2x128xf32> to vector<1x1x2x128xf32>
    %c0_20 = arith.constant 0 : index
    %c0_21 = arith.constant 0 : index
    %c0_22 = arith.constant 0 : index
    %c0_23 = arith.constant 0 : index
    %69 = vector.load %arg3[%c0_20, %c0_21, %c0_22, %c0_23] : memref<1x3x2x128xf32, #tpu.memory_space<vmem>>, vector<1x1x2x128xf32>
    tpu.vector_store %arg3[%c0_20, %c0_21, %c0_22, %c0_23], %68 {strides = array<i32>} : memref<1x3x2x128xf32, #tpu.memory_space<vmem>>, vector<1x1x2x128xf32>,
    %70 = vector.extract_strided_slice %67 {offsets = [0, 2, 0, 0], sizes = [1, 1, 2, 128], strides = [1, 1, 1, 1]} : vector<1x3x2x128xf32> to vector<1x1x2x128xf32>
    %c0_24 = arith.constant 0 : index
    %c1_25 = arith.constant 1 : index
    %c0_26 = arith.constant 0 : index
    %c0_27 = arith.constant 0 : index
    %71 = vector.load %arg3[%c0_24, %c1_25, %c0_26, %c0_27] : memref<1x3x2x128xf32, #tpu.memory_space<vmem>>, vector<1x1x2x128xf32>
    tpu.vector_store %arg3[%c0_24, %c1_25, %c0_26, %c0_27], %70 {strides = array<i32>} : memref<1x3x2x128xf32, #tpu.memory_space<vmem>>, vector<1x1x2x128xf32>,
    %72 = vector.extract_strided_slice %67 {offsets = [0, 0, 0, 0], sizes = [1, 1, 2, 128], strides = [1, 1, 1, 1]} : vector<1x3x2x128xf32> to vector<1x1x2x128xf32>
    %c0_28 = arith.constant 0 : index
    %c2_29 = arith.constant 2 : index
    %c0_30 = arith.constant 0 : index
    %c0_31 = arith.constant 0 : index
    %73 = vector.load %arg3[%c0_28, %c2_29, %c0_30, %c0_31] : memref<1x3x2x128xf32, #tpu.memory_space<vmem>>, vector<1x1x2x128xf32>
    tpu.vector_store %arg3[%c0_28, %c2_29, %c0_30, %c0_31], %72 {strides = array<i32>} : memref<1x3x2x128xf32, #tpu.memory_space<vmem>>, vector<1x1x2x128xf32>,
    return
  }
  func.func @transform_0(%arg0: i32) -> i32 {
    %c0_i32 = arith.constant 0 : i32
    %c0_i32_0 = arith.constant 0 : i32
    return %c0_i32 : i32
  }
  func.func @transform_1(%arg0: i32) -> (i32, i32, i32, i32) {
    %c0_i32 = arith.constant 0 : i32
    %c0_i32_0 = arith.constant 0 : i32
    %c0_i32_1 = arith.constant 0 : i32
    %c0_i32_2 = arith.constant 0 : i32
    return %arg0, %c0_i32, %c0_i32_0, %c0_i32_1 : i32, i32, i32, i32
  }
  func.func @transform_2(%arg0: i32) -> (i32, i32, i32, i32) {
    %c0_i32 = arith.constant 0 : i32
    %c0_i32_0 = arith.constant 0 : i32
    %c0_i32_1 = arith.constant 0 : i32
    %c0_i32_2 = arith.constant 0 : i32
    return %arg0, %c0_i32, %c0_i32_0, %c0_i32_1 : i32, i32, i32, i32
  }
}

</mosaic_0001>

<llo_original>
// kernel: tpu_custom_call.1
$region0: #{tpu_custom_call.1}
  #allocation0 [shape = 'u32[]', space=smem, size = 0x4, offset = 0x4, fixed_abs, tag = 'smem constant byte address 0x4 - core index']
  #allocation1 [shape = 'u32[72,128]{1,0:T(1,128)}', space=vmem, size = 0x9000, scoped, tag = 'internal scratch']
  %s0 = inlined_call_operand.hbm [shape: f32[3], index: 0, kind: input, shape index: {}]
  %s1 = inlined_call_operand.hbm [shape: f32[2,3,2,128], index: 1, kind: input, shape index: {}]
  %s2 = inlined_call_operand.hbm [shape: f32[2,3,2,128], index: 2, kind: output, shape index: {}]
  %s3 = sld [smem:[#allocation0]]
  $region49: #{tpu_custom_call.1} parent=0
    _
  %s5 = ssub.s32 1, %s3
  %s6 = scalar_select 0, %s5, %s3
  $region1: #{tpu_custom_call.1} parent=0
    #allocation2 [shape = 'u8[512]{0}', space=smem, size = 0x200, scoped, tag = 'input window, operand 0, single buffered']
    #allocation3 [shape = 's32[2]{0}', space=sflag, size = 0x8, scoped, tag = 'scoped memory for tpu_custom_call.1']
    #allocation4 [shape = 's32[2]{0}', space=sflag, size = 0x8, scoped, tag = 'scoped memory for tpu_custom_call.1']
    #allocation5 [shape = 's32[2]{0}', space=sflag, size = 0x8, scoped, tag = 'scoped memory for tpu_custom_call.1']
    #allocation6 [shape = 'u8[6144]{0}', space=vmem, size = 0x1800, scoped, tag = 'input window, operand 1']
    #allocation7 [shape = 'u8[6144]{0}', space=vmem, size = 0x1800, scoped, tag = 'output window, operand 0']
    %7 = vsyncpa [#allocation5], 0
    %8 = vsyncpa [#allocation3], 0
    %s9 = scalar_lea.sflag [#allocation3], 1
    %10 = vsyncpa %s9, 0
    %11 = vsyncpa [#allocation4], 0
    %s12 = scalar_lea.sflag [#allocation4], 1
    %13 = vsyncpa %s12, 0
    loop: start=0, step=1, limit=4
    $region2: #{tpu_custom_call.1} parent=1 // loop_pre_header
      _
    $region3: #{tpu_custom_call.1} parent=1 // loop_header
      %s15 = sphi 0, %s19
      %p16 = scmp.ge.s32.totalorder %s15, 4
      %s23 = sphi 0, %s23
      %s25 = sphi 0, %s23
      %s26 = sphi 0, %s25
      %s40 = sphi 0, %s26
      %s46 = sphi 0, %s48
      %s49 = sphi 0, %s46
      %s50 = sphi 0, %s49
      %s66 = sphi 0, %s50
      %s72 = sphi 0, %s74
      %s75 = sphi 0, %s72
      %s76 = sphi 0, %s75
      %s92 = sphi 0, %s76
    $region4: #{tpu_custom_call.1} parent=1 // loop_header_branch
      %18 = sbr.rel (%p16) target = $region8
    $region5: #{tpu_custom_call.1} parent=1 // loop_body
      %s20 = ssub.s32 %s15, 1
      %s21 = ssub.s32 %s15, 2
      %s22 = sadd.s32 %s15, 1
      %s24 = sadd.s32 %s23, 1
      %p27 = scmp.eq.s32.totalorder %s15, 1
      %p28 = scmp.ne.s32.totalorder %s23, %s25
      %p29 = scmp.eq.s32.totalorder %s15, 0
      %p30 = por %p28, %p29
      %p31 = scmp.ne.s32.totalorder %s23, %s25
      %p32 = scmp.eq.s32.totalorder %s20, 1
      %p33 = por %p31, %p32
      %p34 = scmp.ne.s32.totalorder %s25, %s26
      %p35 = scmp.eq.s32.totalorder %s20, 0
      %p36 = por %p34, %p35
      %p37 = scmp.ne.s32.totalorder %s25, %s26
      %p38 = scmp.eq.s32.totalorder %s21, 1
      %p39 = por %p37, %p38
      %p41 = scmp.ne.s32.totalorder %s26, %s40
      %p42 = scmp.eq.s32.totalorder %s21, 0
      %p43 = por %p41, %p42
      %s44 = ssub.s32 %s15, %s22
      %p45 = scmp.eq.s32.totalorder %s44, 0
      %s47 = sadd.s32 %s46, 1
      %s48 = scalar_select %p45, %s46, %s47
      %p51 = pneg %p45
      %p52 = scmp.eq.s32.totalorder %s15, 1
      %p53 = por %p51, %p52
      %p54 = scmp.ne.s32.totalorder %s46, %s49
      %p55 = scmp.eq.s32.totalorder %s15, 0
      %p56 = por %p54, %p55
      %p57 = scmp.ne.s32.totalorder %s46, %s49
      %p58 = scmp.eq.s32.totalorder %s20, 1
      %p59 = por %p57, %p58
      %p60 = scmp.ne.s32.totalorder %s49, %s50
      %p61 = scmp.eq.s32.totalorder %s20, 0
      %p62 = por %p60, %p61
      %p63 = scmp.ne.s32.totalorder %s49, %s50
      %p64 = scmp.eq.s32.totalorder %s21, 1
      %p65 = por %p63, %p64
      %p67 = scmp.ne.s32.totalorder %s50, %s66
      %p68 = scmp.eq.s32.totalorder %s21, 0
      %p69 = por %p67, %p68
      %s70 = ssub.s32 %s15, %s22
      %p71 = scmp.eq.s32.totalorder %s70, 0
      %s73 = sadd.s32 %s72, 1
      %s74 = scalar_select %p71, %s72, %s73
      %p77 = pneg %p71
      %p78 = scmp.eq.s32.totalorder %s15, 1
      %p79 = por %p77, %p78
      %p80 = scmp.ne.s32.totalorder %s72, %s75
      %p81 = scmp.eq.s32.totalorder %s15, 0
      %p82 = por %p80, %p81
      %p83 = scmp.ne.s32.totalorder %s72, %s75
      %p84 = scmp.eq.s32.totalorder %s20, 1
      %p85 = por %p83, %p84
      %p86 = scmp.ne.s32.totalorder %s75, %s76
      %p87 = scmp.eq.s32.totalorder %s20, 0
      %p88 = por %p86, %p87
      %p89 = scmp.ne.s32.totalorder %s75, %s76
      %p90 = scmp.eq.s32.totalorder %s21, 1
      %p91 = por %p89, %p90
      %p93 = scmp.ne.s32.totalorder %s76, %s92
      %p94 = scmp.eq.s32.totalorder %s21, 0
      %p95 = por %p93, %p94
      %p96 = scmp.le.s32.totalorder 1, %s15
      %p97 = scmp.lt.s32.totalorder %s15, 3
      %p98 = pnand %p96, %p97
      %p99 = pneg %p98
      // Predicated region
      $region9: #{tpu_custom_call.1} parent=5 // pred_check
        _
      $region10: #{tpu_custom_call.1} parent=5 // pred_check_branch
        %101 = sbr.rel (%p98) target = $region12
      $region11: #{tpu_custom_call.1} parent=5 // pred_region
        %s102 = ssub.s32 %s15, 1
        // Predicated region
        $region13: #{tpu_custom_call.1} parent=11 // pred_check
          %p103 = pneg %p36
        $region14: #{tpu_custom_call.1} parent=11 // pred_check_branch
          %105 = sbr.rel (%p103) target = $region16
        $region15: #{tpu_custom_call.1} parent=11 // pred_region
          %107 = vsyncadd [#allocation5], 0
          %s109 = sshll.u32 %s0, 4
          %s110 = int_to_ptr.hbm [resolvable:$true] %s109
          %112 = dma.hbm_to_smem %s110, 16, [#allocation2], [#allocation5]
        $region16: #{tpu_custom_call.1} parent=11 // pred_fallthru
          _
      $region12: #{tpu_custom_call.1} parent=5 // pred_fallthru
        _
      %p113 = scmp.lt.s32.totalorder %s15, 2
      // Predicated region
      $region17: #{tpu_custom_call.1} parent=5 // pred_check
        %p114 = pneg %p113
      $region18: #{tpu_custom_call.1} parent=5 // pred_check_branch
        %116 = sbr.rel (%p114) target = $region20
      $region19: #{tpu_custom_call.1} parent=5 // pred_region
        // Predicated region
        $region21: #{tpu_custom_call.1} parent=19 // pred_check
          %p117 = pneg %p56
        $region22: #{tpu_custom_call.1} parent=19 // pred_check_branch
          %119 = sbr.rel (%p117) target = $region24
        $region23: #{tpu_custom_call.1} parent=19 // pred_region
          %s120 = sand.u32 %s46, 1
          %s121 = scalar_lea.sflag [#allocation3], %s120
          %s122 = sand.u32 %s46, 1
          %s123 = smul.addr %s122, 6
          %s124 = scalar_lea.vmem [#allocation6], %s123
          %126 = vsyncadd %s121, 0
          %s127 = smul.addr %s15, 3
          %s128 = smul.addr %s127, 2
          %s129 = scalar_lea.hbm %s1, %s128
          %s130 = sshll.u32 %s129, 4
          %s131 = int_to_ptr.hbm [resolvable:$true] %s130
          %s132 = sshll.u32 %s124, 4
          %s133 = int_to_ptr.vmem [resolvable:$true] %s132
          %138 = dma.hbm_to_vmem [thread:$0]  %s131, 96, %s133, %s121, 32, 32, 2
        $region24: #{tpu_custom_call.1} parent=19 // pred_fallthru
          _
      $region20: #{tpu_custom_call.1} parent=5 // pred_fallthru
        _
      %p139 = scmp.le.s32.totalorder 1, %s15
      %p140 = scmp.lt.s32.totalorder %s15, 3
      %p141 = pnand %p139, %p140
      %p142 = pneg %p141
      // Predicated region
      $region25: #{tpu_custom_call.1} parent=5 // pred_check
        _
      $region26: #{tpu_custom_call.1} parent=5 // pred_check_branch
        %144 = sbr.rel (%p141) target = $region28
      $region27: #{tpu_custom_call.1} parent=5 // pred_region
        %s145 = ssub.s32 %s15, 1
        // Predicated region
        $region29: #{tpu_custom_call.1} parent=27 // pred_check
          %p146 = pneg %p36
        $region30: #{tpu_custom_call.1} parent=27 // pred_check_branch
          %148 = sbr.rel (%p146) target = $region32
        $region31: #{tpu_custom_call.1} parent=27 // pred_region
          %150 = dma.done [#allocation5], 16
        $region32: #{tpu_custom_call.1} parent=27 // pred_fallthru
          _
        %s151 = sand.u32 %s49, 1
        %s152 = scalar_lea.sflag [#allocation3], %s151
        %s153 = sand.u32 %s49, 1
        %s154 = smul.addr %s153, 6
        %s155 = scalar_lea.vmem [#allocation6], %s154
        // Predicated region
        $region33: #{tpu_custom_call.1} parent=27 // pred_check
          %p156 = pneg %p62
        $region34: #{tpu_custom_call.1} parent=27 // pred_check_branch
          %158 = sbr.rel (%p156) target = $region36
        $region35: #{tpu_custom_call.1} parent=27 // pred_region
          %160 = dma.done %s152, 96
        $region36: #{tpu_custom_call.1} parent=27 // pred_fallthru
          _
        %161 = sfence
        %p162 = pneg %p36
        %p163 = pneg %p33
        %s164 = sand.u32 %s49, 1
        %s165 = scalar_lea.sflag [#allocation3], %s164
        %s166 = sand.u32 %s49, 1
        %s167 = smul.addr %s166, 6
        %s168 = scalar_lea.vmem [#allocation6], %s167
        %p169 = pneg %p62
        %p170 = pneg %p59
        %p171 = pneg %p88
        %p172 = pneg %p85
        %s173 = sand.u32 %s75, 1
        %s174 = scalar_lea.sflag [#allocation4], %s173
        %s175 = sand.u32 %s75, 1
        %s176 = smul.addr %s175, 6
        %s177 = scalar_lea.vmem [#allocation7], %s176
        %v178 = vld [vmem:[%s155] sm:$0x3]
        %v179 = vld [vmem:[%s155 + $0x2] sm:$0x3]
        %v180 = vld [vmem:[%s155 + $0x4] sm:$0x3]
        %s181 = sld [smem:[#allocation2]]
        %v182 = vstv %s181
        %v183 = vmul.f32 %v182, %v178
        %v184 = vmul.f32 %v182, %v179
        %v185 = vmul.f32 %v182, %v180
        %v186 = vmax.f32 %v183, 0.0
        %v187 = vmax.f32 %v184, 0.0
        %v188 = vmax.f32 %v185, 0.0
        %v189 = vmin.f32 %v186, 1.0
        %v190 = vmin.f32 %v187, 1.0
        %v191 = vmin.f32 %v188, 1.0
        %s192 = sld [smem:[#allocation2 + $0x2]]
        %v193 = vmul.f32 %v189, 0.2989
        %v194 = vmul.f32 %v190, 0.587
        %v195 = vadd.f32 %v193, %v194
        %v196 = vmul.f32 %v191, 0.114
        %v197 = vadd.f32 %v195, %v196
        %v198 = vstv %s192
        %v199 = vmul.f32 %v198, %v189
        %v200 = vmul.f32 %v198, %v190
        %v201 = vmul.f32 %v198, %v191
        %s202 = ssub.f32 1.0, %s192
        %v203 = vstv %s202
        %v204 = vmul.f32 %v203, %v197
        %v205 = vadd.f32 %v199, %v204
        %v206 = vadd.f32 %v200, %v204
        %v207 = vadd.f32 %v201, %v204
        %v208 = vmax.f32 %v205, 0.0
        %v209 = vmax.f32 %v206, 0.0
        %v210 = vmax.f32 %v207, 0.0
        %v211 = vmin.f32 %v208, 1.0
        %v212 = vmin.f32 %v209, 1.0
        %v213 = vmin.f32 %v210, 1.0
        %s214 = sld [smem:[#allocation2 + $0x1]]
        %v215 = vmul.f32 %v211, 0.2989
        %v216 = vmul.f32 %v212, 0.587
        %v217 = vadd.f32 %v215, %v216
        %v218 = vmul.f32 %v213, 0.114
        %v219 = vadd.f32 %v217, %v218
        %v220 = vlaneseq
        %v221 = vshrl.u32 %v220, 7
        %v222 = vlaneseq
        %v223 = vand.u32 %v222, 127
        %v224 = vmul.u32 %v221, 128
        %v225 = vadd.s32 %v224, %v223
        %vm226 = vcmp.lt.s32.totalorder %v225, 256
        %v227 = vsel %vm226, %v219, 0.0
        %vm228 = vcmask 1041408
        %v229 = vsel %vm228, %v227, 0.0
        %230 = vadd.xlane.f32.xlu0 %v229
        %v231 = vpop.xlane.xlu0 %230
        %v232 = vrot.slane %v231, 4
        %v233 = vadd.f32 %v231, %v232
        %v234 = vrot.slane %v233, 2
        %v235 = vadd.f32 %v233, %v234
        %v236 = vrot.slane %v235, 1
        %v237 = vadd.f32 %v235, %v236
        %v238 = vmul.f32 %v237, 0.00390625
        %v239 = vstv %s214
        %v240 = vmul.f32 %v239, %v211
        %v241 = vmul.f32 %v239, %v212
        %v242 = vmul.f32 %v239, %v213
        %s243 = ssub.f32 1.0, %s214
        %v244 = vstv %s243
        %v245 = vmul.f32 %v244, %v238
        %v246 = vadd.f32 %v240, %v245
        %v247 = vadd.f32 %v241, %v245
        %v248 = vadd.f32 %v242, %v245
        %v249 = vmax.f32 %v246, 0.0
        %v250 = vmax.f32 %v247, 0.0
        %v251 = vmax.f32 %v248, 0.0
        %v252 = vmin.f32 %v249, 1.0
        %v253 = vmin.f32 %v250, 1.0
        %v254 = vmin.f32 %v251, 1.0
        %255 = vst [vmem:[%s177] sm:$0x3] %v253
        %s256 = scalar_lea.vmem %s177, 2 [#allocation7]
        %257 = vst [vmem:[%s256] sm:$0x3] %v254
        %s258 = scalar_lea.vmem %s177, 4 [#allocation7]
        %259 = vst [vmem:[%s258] sm:$0x3] %v252
        %s260 = sand.u32 %s75, 1
        %s261 = scalar_lea.sflag [#allocation4], %s260
        %s262 = sand.u32 %s75, 1
        %s263 = smul.addr %s262, 6
        %s264 = scalar_lea.vmem [#allocation7], %s263
        // Predicated region
        $region37: #{tpu_custom_call.1} parent=27 // pred_check
          %p265 = pneg %p85
        $region38: #{tpu_custom_call.1} parent=27 // pred_check_branch
          %267 = sbr.rel (%p265) target = $region40
        $region39: #{tpu_custom_call.1} parent=27 // pred_region
          %269 = vsyncadd %s261, 0
          %s270 = smul.addr %s20, 3
          %s271 = smul.addr %s270, 2
          %s272 = scalar_lea.hbm %s2, %s271
          %s273 = sshll.u32 %s264, 4
          %s274 = int_to_ptr.vmem [resolvable:$true] %s273
          %s275 = sshll.u32 %s272, 4
          %s276 = int_to_ptr.hbm [resolvable:$true] %s275
          %281 = dma.vmem_to_hbm [thread:$0]  %s274, 96, %s276, %s261, 32, 32, 2
        $region40: #{tpu_custom_call.1} parent=27 // pred_fallthru
          _
      $region28: #{tpu_custom_call.1} parent=5 // pred_fallthru
        _
      %p282 = scmp.le.s32.totalorder 2, %s15
      // Predicated region
      $region41: #{tpu_custom_call.1} parent=5 // pred_check
        %p283 = pneg %p282
      $region42: #{tpu_custom_call.1} parent=5 // pred_check_branch
        %285 = sbr.rel (%p283) target = $region44
      $region43: #{tpu_custom_call.1} parent=5 // pred_region
        %s286 = ssub.s32 %s15, 2
        // Predicated region
        $region45: #{tpu_custom_call.1} parent=43 // pred_check
          %p287 = pneg %p91
        $region46: #{tpu_custom_call.1} parent=43 // pred_check_branch
          %289 = sbr.rel (%p287) target = $region48
        $region47: #{tpu_custom_call.1} parent=43 // pred_region
          %s290 = sand.u32 %s76, 1
          %s291 = scalar_lea.sflag [#allocation4], %s290
          %s292 = sand.u32 %s76, 1
          %s293 = smul.addr %s292, 6
          %s294 = scalar_lea.vmem [#allocation7], %s293
          %296 = dma.done %s291, 96
        $region48: #{tpu_custom_call.1} parent=43 // pred_fallthru
          _
      $region44: #{tpu_custom_call.1} parent=5 // pred_fallthru
        _
    $region6: #{tpu_custom_call.1} parent=1 // loop_footer
      %s19 = sadd.s32 1, %s15
    $region7: #{tpu_custom_call.1} parent=1 // loop_footer_branch
      %14 = sbr.rel target = $region3
    $region8: #{tpu_custom_call.1} parent=1 // loop_exit
      _
    %297 = vsyncpa [#allocation3], 1
    %s298 = scalar_lea.sflag [#allocation3], 1
    %299 = vsyncpa %s298, 1
    %300 = vsyncpa [#allocation4], 1
    %s301 = scalar_lea.sflag [#allocation4], 1
    %302 = vsyncpa %s301, 1
    %303 = vsyncpa [#allocation5], 1
    %s304 = scalar_lea.sflag [#allocation5], 1
    %305 = vsyncpa %s304, 1

</llo_original>
